<compile_context>
chip_gen: v5e
topology: v5e:2x2
jax: 0.10.0
libtpu: 0.0.40
codegen_flags: <defaults>
</compile_context>

<pallas_src>
import math

import jax
import jax.numpy as jnp
import numpy as np
from jax.experimental import pallas as pl
from jax.experimental.pallas import tpu as pltpu


def _fused_kernel(p_ref, w_ref, o_ref):
    # p_ref: (Kp, NSp)  im2col slab, batch folded onto lanes, one ones-row for the bias
    # w_ref: (Cp, Kp)   folded Conv3d x Conv1d weight, bias in the matching column
    # o_ref: (Cp, NSp)  lane-dense output (NSp % 128 == 0 -> unmasked vst)
    o_ref[...] = jnp.dot(
        w_ref[...], p_ref[...], preferred_element_type=jnp.float32
    ).astype(o_ref.dtype)


def _fused_matmul(patches, wf):
    """patches: (Kp, NSp) f32; wf: (Cp, Kp) f32 -> (Cp, NSp) f32. One kernel step."""
    Kp, NSp = patches.shape
    Cp = wf.shape[0]
    cost = pl.CostEstimate(
        flops=2 * Cp * Kp * NSp,
        transcendentals=0,
        bytes_accessed=4 * (Kp * NSp + Cp * Kp + Cp * NSp),
    )
    return pl.pallas_call(
        _fused_kernel,
        out_shape=jax.ShapeDtypeStruct((Cp, NSp), patches.dtype),
        grid=(1,),
        in_specs=[
            pl.BlockSpec((Kp, NSp), lambda i: (0, 0)),  # whole slab in one block
            pl.BlockSpec((Cp, Kp), lambda i: (0, 0)),   # folded weight (+bias col)
        ],
        out_specs=pl.BlockSpec((Cp, NSp), lambda i: (0, 0)),
        cost_estimate=cost,
    )(patches, wf)


def _im2col_slab(x, ksize=(3, 3, 3), stride=(2, 1, 1), padding=(0, 1, 1), dilation=(3, 3, 3)):
    """im2col glue (pure data movement, fused under jit).

    Returns (K, N*S) where K = Cin*kd*kh*kw in w3.reshape(Cout,-1) flattening order and
    the batch is folded onto the last (lane) axis, so one grid-less matmul covers all
    batch elements with no transpose on the output's spatial layout.
    """
    N, C, D, H, W = x.shape
    KD, KH, KW = ksize
    sd, sh, sw = stride
    pd, ph, pw = padding
    dd, dh, dw = dilation
    Do = (D + 2 * pd - dd * (KD - 1) - 1) // sd + 1
    Ho = (H + 2 * ph - dh * (KH - 1) - 1) // sh + 1
    Wo = (W + 2 * pw - dw * (KW - 1) - 1) // sw + 1
    xt = jnp.transpose(x, (1, 0, 2, 3, 4))                         # (C, N, D, H, W)
    xp = jnp.pad(xt, ((0, 0), (0, 0), (pd, pd), (ph, ph), (pw, pw)))
    taps = []
    for kd in range(KD):
        for kh in range(KH):
            for kw in range(KW):
                taps.append(
                    xp[:, :,
                       kd * dd: kd * dd + sd * (Do - 1) + 1: sd,
                       kh * dh: kh * dh + sh * (Ho - 1) + 1: sh,
                       kw * dw: kw * dw + sw * (Wo - 1) + 1: sw])
    p = jnp.stack(taps, axis=1)                                    # (C, T, N, Do, Ho, Wo)
    p = p.reshape(C * KD * KH * KW, N * Do * Ho * Wo)              # (K, N*S)
    return p, (Do, Ho, Wo)


@jax.jit
def model_forward(x1, w3, b3, w2, b2):
    """Pallas implementation of Model.forward.

    v1 = Conv3d(7, 6, [3,3,3], stride=[2,1,1], padding=[0,1,1], dilation=3)(x1)
    v2 = Conv1d(6, 4, 1)(v1)   # pointwise channel mix applied per position
    """
    # TODO(synk): PyTorch's Conv1d rejects 5-D input at runtime; the kernel-size-1
    # Conv1d is interpreted here as the natural pointwise channel mixing over all
    # D,H,W positions (exactly what it computes on any valid reshape of v1).
    N, Cin, D, H, W = x1.shape
    Cout3 = w3.shape[0]
    Cout = w2.shape[0]

    patches, (Do, Ho, Wo) = _im2col_slab(x1)                       # (K, N*S)
    K, NS = patches.shape

    # Algebraic weight/bias fold: (w2 @ w3_flat), (w2 @ b3 + b2). Exact (no nonlinearity).
    w3_flat = w3.reshape(Cout3, -1)                                # (6, K)
    w2m = w2[:, :, 0]                                              # (4, 6)
    wf = w2m @ w3_flat                                             # (4, K)
    bf = w2m @ b3 + b2                                             # (4,)

    # Alignment: K -> multiple of 8 sublanes (with room for one bias row),
    # N*S -> multiple of 128 lanes, out-channels -> 8 sublanes.
    Kp = pl.cdiv(K + 1, 8) * 8
    NSp = pl.cdiv(NS, 128) * 128
    Cp = max(8, pl.cdiv(Cout, 8) * 8)

    patches = jnp.pad(patches, ((0, Kp - K), (0, NSp - NS)))
    patches = patches.at[K, :].set(1.0)                            # bias row (free pad row)
    wf = jnp.pad(wf, ((0, Cp - Cout), (0, Kp - K)))
    wf = wf.at[:Cout, K].set(bf)                                   # bias column

    out = _fused_matmul(patches, wf)                               # (Cp, NSp)
    out = out[:Cout, :NS].reshape(Cout, N, Do, Ho, Wo)
    return jnp.transpose(out, (1, 0, 2, 3, 4))                     # (N, Cout, Do, Ho, Wo)


def _reference(x1, w3, b3, w2, b2):
    v1 = jax.lax.conv_general_dilated(
        x1, w3, window_strides=(2, 1, 1),
        padding=((0, 0), (1, 1), (1, 1)),
        rhs_dilation=(3, 3, 3),
        dimension_numbers=("NCDHW", "OIDHW", "NCDHW"))
    v1 = v1 + b3[None, :, None, None, None]
    v2 = jnp.einsum("oc,ncdhw->nodhw", w2[:, :, 0], v1) + b2[None, :, None, None, None]
    return v2


if __name__ == "__main__":
    key = jax.random.PRNGKey(0)
    k1, k2, k3, k4, k5 = jax.random.split(key, 5)

    # Deterministic parameter init (mimics PyTorch's default uniform(-1/sqrt(fan_in), ...)).
    fan3 = 7 * 3 * 3 * 3
    bnd3 = 1.0 / math.sqrt(fan3)
    w3 = jax.random.uniform(k1, (6, 7, 3, 3, 3), jnp.float32, -bnd3, bnd3)
    b3 = jax.random.uniform(k2, (6,), jnp.float32, -bnd3, bnd3)
    fan2 = 6 * 1
    bnd2 = 1.0 / math.sqrt(fan2)
    w2 = jax.random.uniform(k3, (4, 6, 1), jnp.float32, -bnd2, bnd2)
    b2 = jax.random.uniform(k4, (4,), jnp.float32, -bnd2, bnd2)

    # Input: N=2, Cin=7, D=9, H=W=12 -> Conv3d output (2, 6, 2, 8, 8), final (2, 4, 2, 8, 8)
    x1 = jax.random.normal(k5, (2, 7, 9, 12, 12), jnp.float32)

    out = model_forward(x1, w3, b3, w2, b2)
    out = jax.block_until_ready(out)

    ref = jax.block_until_ready(_reference(x1, w3, b3, w2, b2))
    assert out.shape == (2, 4, 2, 8, 8), out.shape
    np.testing.assert_allclose(np.asarray(out), np.asarray(ref), rtol=1e-4, atol=1e-5)

    print("KERNEL_OK")
</pallas_src>

<mosaic_0001>
module attributes {stable_mosaic.version = 11 : i64} {
  func.func @_fused_kernel(%arg0: i32, %arg1: memref<192x256xf32, #tpu.memory_space<vmem>>, %arg2: memref<8x192xf32, #tpu.memory_space<vmem>>, %arg3: memref<8x256xf32, #tpu.memory_space<vmem>>) attributes {dimension_semantics = [#tpu.dimension_semantics<arbitrary>], iteration_bounds = array<i64: 1>, scalar_prefetch = 0 : i64, scratch_operands = 0 : i64, tpu.core_type = #tpu.core_type<tc>, window_params = [{pipeline_mode = #tpu.pipeline_mode<synchronous>, transform_indices = @transform_0, window_bounds = array<i64: 192, 256>}, {pipeline_mode = #tpu.pipeline_mode<synchronous>, transform_indices = @transform_1, window_bounds = array<i64: 8, 192>}, {pipeline_mode = #tpu.pipeline_mode<synchronous>, transform_indices = @transform_2, window_bounds = array<i64: 8, 256>}]} {
    %c0 = arith.constant 0 : index
    %c0_0 = arith.constant 0 : index
    %0 = vector.load %arg2[%c0, %c0_0] : memref<8x192xf32, #tpu.memory_space<vmem>>, vector<8x192xf32>
    %c0_1 = arith.constant 0 : index
    %c0_2 = arith.constant 0 : index
    %1 = vector.load %arg1[%c0_1, %c0_2] : memref<192x256xf32, #tpu.memory_space<vmem>>, vector<192x256xf32>
    %cst = arith.constant dense<0.000000e+00> : vector<8x256xf32>
    %2 = tpu.matmul %0, %1, %cst {dimension_numbers = #tpu.dot_dimension_numbers<[1], [0], [0], [1], [0, 0, 1, 1], [], []>} : vector<8x192xf32>, vector<192x256xf32>, vector<8x256xf32> -> vector<8x256xf32>
    %c0_3 = arith.constant 0 : index
    %c0_4 = arith.constant 0 : index
    %3 = vector.load %arg3[%c0_3, %c0_4] : memref<8x256xf32, #tpu.memory_space<vmem>>, vector<8x256xf32>
    tpu.vector_store %arg3[%c0_3, %c0_4], %2 {strides = array<i32>} : memref<8x256xf32, #tpu.memory_space<vmem>>, vector<8x256xf32>,
    return
  }
  func.func @transform_0(%arg0: i32) -> (i32, i32) {
    %c0_i32 = arith.constant 0 : i32
    %c0_i32_0 = arith.constant 0 : i32
    %c0_i32_1 = arith.constant 0 : i32
    return %c0_i32, %c0_i32_0 : i32, i32
  }
  func.func @transform_1(%arg0: i32) -> (i32, i32) {
    %c0_i32 = arith.constant 0 : i32
    %c0_i32_0 = arith.constant 0 : i32
    %c0_i32_1 = arith.constant 0 : i32
    return %c0_i32, %c0_i32_0 : i32, i32
  }
  func.func @transform_2(%arg0: i32) -> (i32, i32) {
    %c0_i32 = arith.constant 0 : i32
    %c0_i32_0 = arith.constant 0 : i32
    %c0_i32_1 = arith.constant 0 : i32
    return %c0_i32, %c0_i32_0 : i32, i32
  }
}

</mosaic_0001>

<llo_original>
// kernel: model_forward.1
$region0: #{model_forward.1}
  #allocation0 [shape = 'u32[]', space=smem, size = 0x4, offset = 0x4, fixed_abs, tag = 'smem constant byte address 0x4 - core index']
  #allocation1 [shape = 'u32[72,128]{1,0:T(1,128)}', space=vmem, size = 0x9000, scoped, tag = 'internal scratch']
  %s0 = inlined_call_operand.vmem [shape: f32[192,256], index: 0, kind: input, shape index: {}]
  %s1 = inlined_call_operand.vmem [shape: f32[8,192], index: 1, kind: input, shape index: {}]
  %s2 = inlined_call_operand.vmem [shape: f32[8,256], index: 2, kind: output, shape index: {}]
  %s3 = sld [smem:[#allocation0]]
  $region18: #{model_forward.1} parent=0
    _
  %s5 = ssub.s32 1, %s3
  %s6 = scalar_select 0, %s5, %s3
  // Predicated region
  $region2: #{model_forward.1} parent=0 // pred_check
    _
  $region3: #{model_forward.1} parent=0 // pred_check_branch
    %8 = sbr.rel (0) target = $region5
  $region4: #{model_forward.1} parent=0 // pred_region
    _
  $region5: #{model_forward.1} parent=0 // pred_fallthru
    _
  // Predicated region
  $region6: #{model_forward.1} parent=0 // pred_check
    _
  $region7: #{model_forward.1} parent=0 // pred_check_branch
    %10 = sbr.rel (0) target = $region9
  $region8: #{model_forward.1} parent=0 // pred_region
    _
  $region9: #{model_forward.1} parent=0 // pred_fallthru
    _
  %v11 = vld [vmem:[%s1] sm:$0xff]
  %v12 = vld [vmem:[%s1 + $0x8] sm:$0xff]
  %v13 = vld [vmem:[%s0] sm:$0xff]
  %v14 = vld [vmem:[%s0 + $0x8] sm:$0xff]
  %v15 = vld [vmem:[%s0 + $0x10] sm:$0xff]
  %v16 = vld [vmem:[%s0 + $0x18] sm:$0xff]
  %v17 = vld [vmem:[%s0 + $0x20] sm:$0xff]
  %v18 = vld [vmem:[%s0 + $0x28] sm:$0xff]
  %v19 = vld [vmem:[%s0 + $0x30] sm:$0xff]
  %v20 = vld [vmem:[%s0 + $0x38] sm:$0xff]
  %v21 = vld [vmem:[%s0 + $0x40] sm:$0xff]
  %v22 = vld [vmem:[%s0 + $0x48] sm:$0xff]
  %v23 = vld [vmem:[%s0 + $0x50] sm:$0xff]
  %v24 = vld [vmem:[%s0 + $0x58] sm:$0xff]
  %v25 = vld [vmem:[%s0 + $0x60] sm:$0xff]
  %v26 = vld [vmem:[%s0 + $0x68] sm:$0xff]
  %v27 = vld [vmem:[%s0 + $0x70] sm:$0xff]
  %v28 = vld [vmem:[%s0 + $0x78] sm:$0xff]
  %v29 = vld [vmem:[%s0 + $0x80] sm:$0xff]
  %v30 = vld [vmem:[%s0 + $0x88] sm:$0xff]
  %v31 = vld [vmem:[%s0 + $0x90] sm:$0xff]
  %v32 = vld [vmem:[%s0 + $0x98] sm:$0xff]
  %v33 = vld [vmem:[%s0 + $0xa0] sm:$0xff]
  %v34 = vld [vmem:[%s0 + $0xa8] sm:$0xff]
  %v35 = vld [vmem:[%s0 + $0xb0] sm:$0xff]
  %v36 = vld [vmem:[%s0 + $0xb8] sm:$0xff]
  %v37 = vld [vmem:[%s0 + $0xc0] sm:$0xff]
  %v38 = vld [vmem:[%s0 + $0xc8] sm:$0xff]
  %v39 = vld [vmem:[%s0 + $0xd0] sm:$0xff]
  %v40 = vld [vmem:[%s0 + $0xd8] sm:$0xff]
  %v41 = vld [vmem:[%s0 + $0xe0] sm:$0xff]
  %v42 = vld [vmem:[%s0 + $0xe8] sm:$0xff]
  %v43 = vld [vmem:[%s0 + $0xf0] sm:$0xff]
  %v44 = vld [vmem:[%s0 + $0xf8] sm:$0xff]
  %v45 = vld [vmem:[%s0 + $0x100] sm:$0xff]
  %v46 = vld [vmem:[%s0 + $0x108] sm:$0xff]
  %v47 = vld [vmem:[%s0 + $0x110] sm:$0xff]
  %v48 = vld [vmem:[%s0 + $0x118] sm:$0xff]
  %v49 = vld [vmem:[%s0 + $0x120] sm:$0xff]
  %v50 = vld [vmem:[%s0 + $0x128] sm:$0xff]
  %v51 = vld [vmem:[%s0 + $0x130] sm:$0xff]
  %v52 = vld [vmem:[%s0 + $0x138] sm:$0xff]
  %v53 = vld [vmem:[%s0 + $0x140] sm:$0xff]
  %v54 = vld [vmem:[%s0 + $0x148] sm:$0xff]
  %v55 = vld [vmem:[%s0 + $0x150] sm:$0xff]
  %v56 = vld [vmem:[%s0 + $0x158] sm:$0xff]
  %v57 = vld [vmem:[%s0 + $0x160] sm:$0xff]
  %v58 = vld [vmem:[%s0 + $0x168] sm:$0xff]
  %v59 = vld [vmem:[%s0 + $0x170] sm:$0xff]
  %v60 = vld [vmem:[%s0 + $0x178] sm:$0xff]
  %vm61 = vcmask 523264
  %v63 = vsel %vm61, %v12, 0
  %65 = vmatpush.msra.mxu0 %v43
  %66 = vmatpush.msra.mxu0 %v41
  %67 = vmatpush.msra.mxu0 %v39
  %68 = vmatpush.msra.mxu0 %v37
  %69 = vmatpush.msra.mxu0 %v35
  %70 = vmatpush.msra.mxu0 %v33
  %71 = vmatpush.msra.mxu0 %v31
  %72 = vmatpush.msra.mxu0 %v29
  %73 = vmatpush.msra.mxu0 %v27
  %74 = vmatpush.msra.mxu0 %v25
  %75 = vmatpush.msra.mxu0 %v23
  %76 = vmatpush.msra.mxu0 %v21
  %77 = vmatpush.msra.mxu0 %v19
  %78 = vmatpush.msra.mxu0 %v17
  %79 = vmatpush.msra.mxu0 %v15
  %80 = vmatpush.msra.mxu0 %v13
  %81 = vmatmul.f32.gmra.mxu0 %v11
  %v82 = vpop.f32.mrf.mxu0
  %v83 = vadd.f32 0.0, %v82
  %84 = vdwg.mxu0
  %85 = vmatpush.msra.mxu0 0.0
  %86 = vmatpush.msra.mxu0 0.0
  %87 = vmatpush.msra.mxu0 0.0
  %88 = vmatpush.msra.mxu0 0.0
  %89 = vmatpush.msra.mxu0 0.0
  %90 = vmatpush.msra.mxu0 0.0
  %91 = vmatpush.msra.mxu0 0.0
  %92 = vmatpush.msra.mxu0 0.0
  %93 = vmatpush.msra.mxu0 %v59
  %94 = vmatpush.msra.mxu0 %v57
  %95 = vmatpush.msra.mxu0 %v55
  %96 = vmatpush.msra.mxu0 %v53
  %97 = vmatpush.msra.mxu0 %v51
  %98 = vmatpush.msra.mxu0 %v49
  %99 = vmatpush.msra.mxu0 %v47
  %100 = vmatpush.msra.mxu0 %v45
  %101 = vmatmul.f32.gmra.mxu0 %v63
  %v102 = vpop.f32.mrf.mxu0
  %v103 = vadd.f32 %v83, %v102
  %104 = vdwg.mxu0
  %105 = vmatpush.msra.mxu0 %v44
  %106 = vmatpush.msra.mxu0 %v42
  %107 = vmatpush.msra.mxu0 %v40
  %108 = vmatpush.msra.mxu0 %v38
  %109 = vmatpush.msra.mxu0 %v36
  %110 = vmatpush.msra.mxu0 %v34
  %111 = vmatpush.msra.mxu0 %v32
  %112 = vmatpush.msra.mxu0 %v30
  %113 = vmatpush.msra.mxu0 %v28
  %114 = vmatpush.msra.mxu0 %v26
  %115 = vmatpush.msra.mxu0 %v24
  %116 = vmatpush.msra.mxu0 %v22
  %117 = vmatpush.msra.mxu0 %v20
  %118 = vmatpush.msra.mxu0 %v18
  %119 = vmatpush.msra.mxu0 %v16
  %120 = vmatpush.msra.mxu0 %v14
  %121 = vmatmul.f32.gmra.mxu0 %v11
  %v122 = vpop.f32.mrf.mxu0
  %v123 = vadd.f32 0.0, %v122
  %124 = vdwg.mxu0
  %125 = vmatpush.msra.mxu0 0.0
  %126 = vmatpush.msra.mxu0 0.0
  %127 = vmatpush.msra.mxu0 0.0
  %128 = vmatpush.msra.mxu0 0.0
  %129 = vmatpush.msra.mxu0 0.0
  %130 = vmatpush.msra.mxu0 0.0
  %131 = vmatpush.msra.mxu0 0.0
  %132 = vmatpush.msra.mxu0 0.0
  %133 = vmatpush.msra.mxu0 %v60
  %134 = vmatpush.msra.mxu0 %v58
  %135 = vmatpush.msra.mxu0 %v56
  %136 = vmatpush.msra.mxu0 %v54
  %137 = vmatpush.msra.mxu0 %v52
  %138 = vmatpush.msra.mxu0 %v50
  %139 = vmatpush.msra.mxu0 %v48
  %140 = vmatpush.msra.mxu0 %v46
  %141 = vmatmul.f32.gmra.mxu0 %v63
  %v142 = vpop.f32.mrf.mxu0
  %v143 = vadd.f32 %v123, %v142
  %144 = vdwg.mxu0
  %145 = vst [vmem:[%s2] sm:$0xff] %v103
  %146 = vst [vmem:[%s2 + $0x8] sm:$0xff] %v143
  // Predicated region
  $region10: #{model_forward.1} parent=0 // pred_check
    _
  $region11: #{model_forward.1} parent=0 // pred_check_branch
    %148 = sbr.rel (0) target = $region13
  $region12: #{model_forward.1} parent=0 // pred_region
    _
  $region13: #{model_forward.1} parent=0 // pred_fallthru
    _
  // Predicated region
  $region14: #{model_forward.1} parent=0 // pred_check
    _
  $region15: #{model_forward.1} parent=0 // pred_check_branch
    %150 = sbr.rel (0) target = $region17
  $region16: #{model_forward.1} parent=0 // pred_region
    _
  $region17: #{model_forward.1} parent=0 // pred_fallthru
    _

</llo_original>
